<compile_context>
chip_gen: v7x
topology: tpu7x:2x2x1
jax: 0.10.0
libtpu: 0.0.40
codegen_flags: <defaults>
</compile_context>

<pallas_src>
import functools
import math

import jax
import jax.numpy as jnp
from jax.experimental import pallas as pl
from jax.experimental.pallas import tpu as pltpu


def _decoder_kernel(x_ref, w1_ref, b1_ref, w2t_ref, b2_ref, o_ref, *,
                    BN, M, L, Lq, append):
    """One grid step: BN batch elements, time kept in lanes throughout.

    x_ref:   (BN, Cin, L)        compute dtype (native NCL layout)
    w1_ref:  (Cin, Cin)          compute dtype, 1x1-conv weight (out-major rows)
    b1_ref:  (Cin, 1)            f32
    w2t_ref: (S*Cout, M*Cin)     compute dtype, fused transposed-conv weight:
                                 w2t[p*Cout + c, m*Cin + i] = w2[i, c, p + m*S]
    b2_ref:  (S*Cout, 1)         f32
    o_ref:   (1, S*Cout, BN*Lq)  f32; column block b = batch element b,
                                 out[p*Cout + c, q] = y[c, q*S + p]
    """
    cin = x_ref.shape[1]
    cdt = w2t_ref.dtype

    # ---- 1x1 Conv1d + bias + ReLU, batched into a single MXU matmul ------------
    # Fold the batch into lanes: (Cin, BN*L).
    x_big = jnp.concatenate([x_ref[b] for b in range(BN)], axis=-1)
    h = jnp.dot(w1_ref[...], x_big, preferred_element_type=jnp.float32)
    h = jnp.maximum(h + b1_ref[...], 0.0)           # f32 epilogue, added exactly once
    h = h.astype(cdt)                                # single downcast of the activations

    # ---- Build H_concat^T in registers: row block m = h shifted right by m -----
    blocks = []
    for b in range(BN):
        h_b = h[:, b * L:(b + 1) * L]                                   # (Cin, L)
        if M > 1:
            zpad = jnp.zeros((cin, M - 1), cdt)
            h_pad = jnp.concatenate([zpad, h_b, zpad], axis=-1)         # (Cin, L+2(M-1))
        else:
            h_pad = h_b
        taps = [h_pad[:, M - 1 - m:M - 1 - m + Lq] for m in range(M)]   # each (Cin, Lq)
        blocks.append(jnp.concatenate(taps, axis=0))                    # (M*Cin, Lq)
    hcat = jnp.concatenate(blocks, axis=-1)                             # (M*Cin, BN*Lq)

    # ---- One fused MXU matmul over all taps (K dim) / phases+channels (rows) ---
    acc = jnp.dot(w2t_ref[...], hcat, preferred_element_type=jnp.float32)
    acc = acc + b2_ref[...]                          # bias once, f32
    if append:
        acc = jnp.maximum(acc, 0.0)
    o_ref[0] = acc                                   # time axis (BN*Lq) in lanes


@functools.partial(jax.jit,
                   static_argnames=("kernel_size", "stride", "append", "compute_dtype"))
def decoder_block_forward(x_ncl, w1, b1, w2, b2, kernel_size, stride, append,
                          compute_dtype=jnp.bfloat16):
    """x_ncl: (N, Cin, L) f32 -> (N, Cout, Lout) f32, Lout = (L-1)*stride + kernel_size.

    Phase decomposition of the transposed conv (kernel zero-padded to M*S taps):
        y[c, q*S + p] = b2[c] + sum_m sum_i h[i, q - m] * w2[i, c, p + m*S]
    realised as a single fused matmul per grid step with the time axis in lanes.
    """
    N, Cin, L = x_ncl.shape
    Cout = w2.shape[1]
    K, S = kernel_size, stride
    M = -(-K // S)                      # taps per output phase (ceil(K / S))
    Kp = M * S                          # kernel length padded to a multiple of S
    Lq = L + M - 1                      # per-phase output length
    Lout = (L - 1) * S + K
    Sc = S * Cout

    # Batch tile: fold enough batch elements per grid step that the lane axes of the
    # output (BN*Lq) and of the 1x1-conv matmul (BN*L) are reasonably wide.
    BN = max(1, min(N, min(64, -(-512 // Lq))))
    Npad = -(-N // BN) * BN
    Tn = Npad // BN

    x_in = x_ncl.astype(compute_dtype)                               # NCL kept, cast only
    if Npad != N:
        x_in = jnp.pad(x_in, ((0, Npad - N), (0, 0), (0, 0)))

    # --- parameter massaging (tiny, one-off) ---
    w1m = w1[:, :, 0].astype(compute_dtype)                          # (Cin, Cin)
    w2k = jnp.transpose(w2, (2, 0, 1)).astype(jnp.float32)           # (K, Cin, Cout)
    w2k = jnp.pad(w2k, ((0, Kp - K), (0, 0), (0, 0)))                # (Kp, Cin, Cout)
    w2t = (w2k.reshape(M, S, Cin, Cout)
               .transpose(1, 3, 0, 2)                                 # (S, Cout, M, Cin)
               .reshape(Sc, M * Cin)
               .astype(compute_dtype))
    b1c = b1.reshape(Cin, 1).astype(jnp.float32)
    b2c = jnp.tile(b2, S).reshape(Sc, 1).astype(jnp.float32)         # row p*Cout+c -> b2[c]

    kernel = functools.partial(_decoder_kernel, BN=BN, M=M, L=L, Lq=Lq, append=append)

    out = pl.pallas_call(
        kernel,
        out_shape=jax.ShapeDtypeStruct((Tn, Sc, BN * Lq), jnp.float32),
        grid_spec=pltpu.PrefetchScalarGridSpec(
            num_scalar_prefetch=0,
            grid=(Tn,),
            in_specs=[
                pl.BlockSpec((BN, Cin, L), lambda n: (n, 0, 0)),
                # NOTE: the 4 operands below are grid-invariant.  At production
                # Cin/Cout/L, mark them pipeline_mode=pl.Buffered(1), add an L-tile grid
                # axis with an (M-1)-column halo, and set vmem_limit_bytes explicitly
                # (v7x has only 64 MiB VMEM).  At these shapes they are a few KB.
                pl.BlockSpec((Cin, Cin), lambda n: (0, 0)),
                pl.BlockSpec((Cin, 1), lambda n: (0, 0)),
                pl.BlockSpec((Sc, M * Cin), lambda n: (0, 0)),
                pl.BlockSpec((Sc, 1), lambda n: (0, 0)),
            ],
            out_specs=pl.BlockSpec((1, Sc, BN * Lq), lambda n: (n, 0, 0)),
        ),
        compiler_params=pltpu.CompilerParams(dimension_semantics=("parallel",)),
    )(x_in, w1m, b1c, w2t, b2c)

    # Un-interleave phases/batch: out[t, p*Cout + c, b*Lq + q] -> y[t*BN+b, c, q*S+p].
    # (Time positions >= Lout only ever carry bias/ReLU of zero taps; sliced off here.)
    y = out.reshape(Tn, S, Cout, BN, Lq)
    y = jnp.transpose(y, (0, 3, 2, 4, 1))            # (Tn, BN, Cout, Lq, S)
    y = y.reshape(Npad, Cout, Lq * S)[:N, :, :Lout]  # one fused permutation+slice copy
    return y                                          # (N, Cout, Lout), NCL like PyTorch


def ref_forward(x, w1, b1, w2, b2, K, S, append):
    """Pure-JAX f32 reference matching PyTorch Conv1d/ConvTranspose1d semantics (NCL)."""
    h = jnp.einsum('oc,ncl->nol', w1[:, :, 0], x) + b1[None, :, None]
    h = jnp.maximum(h, 0.0)
    N, Cin, L = h.shape
    Cout = w2.shape[1]
    Lout = (L - 1) * S + K
    out = jnp.zeros((N, Cout, Lout), jnp.float32) + b2[None, :, None]
    for l in range(L):
        for k in range(K):
            out = out.at[:, :, l * S + k].add(
                jnp.einsum('ni,io->no', h[:, :, l], w2[:, :, k]))
    if append:
        out = jnp.maximum(out, 0.0)
    return out


if __name__ == "__main__":
    N, Cin, Cout, L = 2, 16, 8, 24
    K, S = 8, 4               # Demucs-style: kernel_size = 2 * stride (overlapping taps)
    append = True

    key = jax.random.PRNGKey(0)
    k1, k2, k3, k4, k5 = jax.random.split(key, 5)
    x = jax.random.normal(k1, (N, Cin, L), jnp.float32)
    w1 = jax.random.normal(k2, (Cin, Cin, 1), jnp.float32) / math.sqrt(Cin)
    b1 = jax.random.normal(k3, (Cin,), jnp.float32) * 0.1
    w2 = jax.random.normal(k4, (Cin, Cout, K), jnp.float32) / math.sqrt(Cin * K)
    b2 = jax.random.normal(k5, (Cout,), jnp.float32) * 0.1

    ref = ref_forward(x, w1, b1, w2, b2, K, S, append)
    Lout = (L - 1) * S + K

    # Default bf16-compute path (bf16 matmul inputs, f32 accumulation + epilogue).
    out_bf16 = decoder_block_forward(x, w1, b1, w2, b2,
                                     kernel_size=K, stride=S, append=append)
    out_bf16 = jax.block_until_ready(out_bf16)
    assert out_bf16.shape == ref.shape == (N, Cout, Lout), (out_bf16.shape, ref.shape)
    assert jnp.allclose(out_bf16, ref, atol=5e-2, rtol=5e-2), \
        float(jnp.max(jnp.abs(out_bf16 - ref)))

    # f32-compute parity path (same kernel, compute_dtype=f32).
    out_f32 = decoder_block_forward(x, w1, b1, w2, b2,
                                    kernel_size=K, stride=S, append=append,
                                    compute_dtype=jnp.float32)
    out_f32 = jax.block_until_ready(out_f32)
    assert jnp.allclose(out_f32, ref, atol=5e-2, rtol=5e-2), \
        float(jnp.max(jnp.abs(out_f32 - ref)))

    print("KERNEL_OK")
</pallas_src>

<mosaic_0001>
module attributes {stable_mosaic.version = 11 : i64} {
  func.func @_decoder_kernel(%arg0: i32, %arg1: memref<2x16x24xbf16, #tpu.memory_space<vmem>>, %arg2: memref<16x16xbf16, #tpu.memory_space<vmem>>, %arg3: memref<16x1xf32, #tpu.memory_space<vmem>>, %arg4: memref<32x32xbf16, #tpu.memory_space<vmem>>, %arg5: memref<32x1xf32, #tpu.memory_space<vmem>>, %arg6: memref<1x32x50xf32, #tpu.memory_space<vmem>>) attributes {dimension_semantics = [#tpu.dimension_semantics<parallel>], iteration_bounds = array<i64: 1>, scalar_prefetch = 0 : i64, scratch_operands = 0 : i64, tpu.core_type = #tpu.core_type<tc>, window_params = [{transform_indices = @transform_0, window_bounds = array<i64: 2, 16, 24>}, {pipeline_mode = #tpu.pipeline_mode<synchronous>, transform_indices = @transform_1, window_bounds = array<i64: 16, 16>}, {pipeline_mode = #tpu.pipeline_mode<synchronous>, transform_indices = @transform_2, window_bounds = array<i64: 16, 1>}, {pipeline_mode = #tpu.pipeline_mode<synchronous>, transform_indices = @transform_3, window_bounds = array<i64: 32, 32>}, {pipeline_mode = #tpu.pipeline_mode<synchronous>, transform_indices = @transform_4, window_bounds = array<i64: 32, 1>}, {transform_indices = @transform_5, window_bounds = array<i64: 1, 32, 50>}]} {
    %c0 = arith.constant 0 : index
    %c0_0 = arith.constant 0 : index
    %c0_1 = arith.constant 0 : index
    %0 = vector.load %arg1[%c0, %c0_0, %c0_1] : memref<2x16x24xbf16, #tpu.memory_space<vmem>>, vector<1x16x24xbf16>
    %1 = vector.shape_cast %0 : vector<1x16x24xbf16> to vector<16x24xbf16>
    %c1 = arith.constant 1 : index
    %c0_2 = arith.constant 0 : index
    %c0_3 = arith.constant 0 : index
    %2 = vector.load %arg1[%c1, %c0_2, %c0_3] : memref<2x16x24xbf16, #tpu.memory_space<vmem>>, vector<1x16x24xbf16>
    %3 = vector.shape_cast %2 : vector<1x16x24xbf16> to vector<16x24xbf16>
    %4 = tpu.concatenate %1, %3 in 1 : vector<16x24xbf16>, vector<16x24xbf16> -> vector<16x48xbf16>
    %c0_4 = arith.constant 0 : index
    %c0_5 = arith.constant 0 : index
    %5 = vector.load %arg2[%c0_4, %c0_5] : memref<16x16xbf16, #tpu.memory_space<vmem>>, vector<16x16xbf16>
    %cst = arith.constant dense<0.000000e+00> : vector<16x48xf32>
    %6 = tpu.matmul %5, %4, %cst {dimension_numbers = #tpu.dot_dimension_numbers<[1], [0], [0], [1], [0, 0, 1, 1], [], []>} : vector<16x16xbf16>, vector<16x48xbf16>, vector<16x48xf32> -> vector<16x48xf32>
    %c0_6 = arith.constant 0 : index
    %c0_7 = arith.constant 0 : index
    %7 = vector.load %arg3[%c0_6, %c0_7] : memref<16x1xf32, #tpu.memory_space<vmem>>, vector<16x1xf32>
    %8 = vector.broadcast %7 : vector<16x1xf32> to vector<16x48xf32>
    %9 = arith.addf %6, %8 : vector<16x48xf32>
    %cst_8 = arith.constant 0.000000e+00 : f32
    %10 = vector.broadcast %cst_8 : f32 to vector<16x48xf32>
    %11 = arith.maximumf %9, %10 : vector<16x48xf32>
    %12 = arith.truncf %11 : vector<16x48xf32> to vector<16x48xbf16>
    %13 = vector.extract_strided_slice %12 {offsets = [0, 0], sizes = [16, 24], strides = [1, 1]} : vector<16x48xbf16> to vector<16x24xbf16>
    %cst_9 = arith.constant 0.000000e+00 : bf16
    %14 = vector.broadcast %cst_9 : bf16 to vector<16x1xbf16>
    %15 = tpu.concatenate %14, %13, %14 in 1 : vector<16x1xbf16>, vector<16x24xbf16>, vector<16x1xbf16> -> vector<16x26xbf16>
    %16 = vector.extract_strided_slice %15 {offsets = [0, 1], sizes = [16, 25], strides = [1, 1]} : vector<16x26xbf16> to vector<16x25xbf16>
    %17 = vector.extract_strided_slice %15 {offsets = [0, 0], sizes = [16, 25], strides = [1, 1]} : vector<16x26xbf16> to vector<16x25xbf16>
    %18 = tpu.concatenate %16, %17 in 0 : vector<16x25xbf16>, vector<16x25xbf16> -> vector<32x25xbf16>
    %19 = vector.extract_strided_slice %12 {offsets = [0, 24], sizes = [16, 24], strides = [1, 1]} : vector<16x48xbf16> to vector<16x24xbf16>
    %cst_10 = arith.constant 0.000000e+00 : bf16
    %20 = vector.broadcast %cst_10 : bf16 to vector<16x1xbf16>
    %21 = tpu.concatenate %20, %19, %20 in 1 : vector<16x1xbf16>, vector<16x24xbf16>, vector<16x1xbf16> -> vector<16x26xbf16>
    %22 = vector.extract_strided_slice %21 {offsets = [0, 1], sizes = [16, 25], strides = [1, 1]} : vector<16x26xbf16> to vector<16x25xbf16>
    %23 = vector.extract_strided_slice %21 {offsets = [0, 0], sizes = [16, 25], strides = [1, 1]} : vector<16x26xbf16> to vector<16x25xbf16>
    %24 = tpu.concatenate %22, %23 in 0 : vector<16x25xbf16>, vector<16x25xbf16> -> vector<32x25xbf16>
    %25 = tpu.concatenate %18, %24 in 1 : vector<32x25xbf16>, vector<32x25xbf16> -> vector<32x50xbf16>
    %c0_11 = arith.constant 0 : index
    %c0_12 = arith.constant 0 : index
    %26 = vector.load %arg4[%c0_11, %c0_12] : memref<32x32xbf16, #tpu.memory_space<vmem>>, vector<32x32xbf16>
    %cst_13 = arith.constant dense<0.000000e+00> : vector<32x50xf32>
    %27 = tpu.matmul %26, %25, %cst_13 {dimension_numbers = #tpu.dot_dimension_numbers<[1], [0], [0], [1], [0, 0, 1, 1], [], []>} : vector<32x32xbf16>, vector<32x50xbf16>, vector<32x50xf32> -> vector<32x50xf32>
    %c0_14 = arith.constant 0 : index
    %c0_15 = arith.constant 0 : index
    %28 = vector.load %arg5[%c0_14, %c0_15] : memref<32x1xf32, #tpu.memory_space<vmem>>, vector<32x1xf32>
    %29 = vector.broadcast %28 : vector<32x1xf32> to vector<32x50xf32>
    %30 = arith.addf %27, %29 : vector<32x50xf32>
    %cst_16 = arith.constant 0.000000e+00 : f32
    %31 = vector.broadcast %cst_16 : f32 to vector<32x50xf32>
    %32 = arith.maximumf %30, %31 : vector<32x50xf32>
    %c0_17 = arith.constant 0 : index
    %c0_18 = arith.constant 0 : index
    %c0_19 = arith.constant 0 : index
    %33 = vector.load %arg6[%c0_17, %c0_18, %c0_19] : memref<1x32x50xf32, #tpu.memory_space<vmem>>, vector<1x32x50xf32>
    %34 = vector.shape_cast %33 : vector<1x32x50xf32> to vector<32x50xf32>
    %35 = vector.shape_cast %32 : vector<32x50xf32> to vector<1x32x50xf32>
    tpu.vector_store %arg6[%c0_17, %c0_18, %c0_19], %35 {strides = array<i32>} : memref<1x32x50xf32, #tpu.memory_space<vmem>>, vector<1x32x50xf32>,
    return
  }
  func.func @transform_0(%arg0: i32) -> (i32, i32, i32) {
    %c0_i32 = arith.constant 0 : i32
    %c0_i32_0 = arith.constant 0 : i32
    %c0_i32_1 = arith.constant 0 : i32
    return %arg0, %c0_i32, %c0_i32_0 : i32, i32, i32
  }
  func.func @transform_1(%arg0: i32) -> (i32, i32) {
    %c0_i32 = arith.constant 0 : i32
    %c0_i32_0 = arith.constant 0 : i32
    %c0_i32_1 = arith.constant 0 : i32
    return %c0_i32, %c0_i32_0 : i32, i32
  }
  func.func @transform_2(%arg0: i32) -> (i32, i32) {
    %c0_i32 = arith.constant 0 : i32
    %c0_i32_0 = arith.constant 0 : i32
    %c0_i32_1 = arith.constant 0 : i32
    return %c0_i32, %c0_i32_0 : i32, i32
  }
  func.func @transform_3(%arg0: i32) -> (i32, i32) {
    %c0_i32 = arith.constant 0 : i32
    %c0_i32_0 = arith.constant 0 : i32
    %c0_i32_1 = arith.constant 0 : i32
    return %c0_i32, %c0_i32_0 : i32, i32
  }
  func.func @transform_4(%arg0: i32) -> (i32, i32) {
    %c0_i32 = arith.constant 0 : i32
    %c0_i32_0 = arith.constant 0 : i32
    %c0_i32_1 = arith.constant 0 : i32
    return %c0_i32, %c0_i32_0 : i32, i32
  }
  func.func @transform_5(%arg0: i32) -> (i32, i32, i32) {
    %c0_i32 = arith.constant 0 : i32
    %c0_i32_0 = arith.constant 0 : i32
    %c0_i32_1 = arith.constant 0 : i32
    return %arg0, %c0_i32, %c0_i32_0 : i32, i32, i32
  }
}

</mosaic_0001>

<llo_original>
// kernel: tile.8
$region0: #{tile.8}
  #allocation0 [shape = 's32[1]{0}', space=sflag, size = 0x4, scoped, tag = 'scoped memory for tile.8']
  %s0 = inlined_call_operand.vmem [shape: f32[8], index: 0, kind: input, shape index: {}]
  %s1 = inlined_call_operand.vmem [shape: f32[4,8], index: 1, kind: output, shape index: {}]
  // Predicated region
  $region2: #{tile.8} parent=0 // pred_check
    _
  $region3: #{tile.8} parent=0 // pred_check_branch
    %3 = sbr.rel (0) target = $region5
  $region4: #{tile.8} parent=0 // pred_region
    _
  $region5: #{tile.8} parent=0 // pred_fallthru
    _
  %v4 = vld [vmem:[%s0] ss:$0 sm:$0xff]
  %5 = vst [vmem:[%s1] sm:$0xf] %v4

// kernel: tile.0
$region0: #{tile.0}
  %s0 = inlined_call_operand.vmem [shape: f32[4,8], index: 0, kind: input, shape index: {}]
  %s1 = inlined_call_operand.vmem [shape: f32[32,1], index: 1, kind: output, shape index: {}]
  $region1: #{tile.0} parent=0
    #allocation0 [shape = 'u8[4096]{0}', space=vmem, size = 0x1000, scoped, tag = 'scoped mem for input reshape']
    %s3 = sshllo.u32 0, 4
    %v4 = vld [vmem:[%s0] sm:%s3]
    %5 = vst [vmem:[#allocation0] sm:%s3] %v4
    %v6 = vld [vmem:[#allocation0] sm:$0xf]
    %vm7 = vcmask 7168
    %8 = vst.msk [vmem:[%s1] ss:$8 sm:$0xf] %vm7, %v6
    %v9 = vld [vmem:[#allocation0] sm:$0xf]
    %10 = vrot.lane.b32.xlu0 %v9, 127
    %v11 = vpop.permute.xlu0 %10
    %vm12 = vcmask 7168
    %s13 = scalar_lea.vmem %s1, 1
    %14 = vst.msk [vmem:[%s13] ss:$8 sm:$0xf] %vm12, %v11
    %v15 = vld [vmem:[#allocation0] sm:$0xf]
    %16 = vrot.lane.b32.xlu0 %v15, 126
    %v17 = vpop.permute.xlu0 %16
    %vm18 = vcmask 7168
    %s19 = scalar_lea.vmem %s1, 2
    %20 = vst.msk [vmem:[%s19] ss:$8 sm:$0xf] %vm18, %v17
    %v21 = vld [vmem:[#allocation0] sm:$0xf]
    %22 = vrot.lane.b32.xlu0 %v21, 125
    %v23 = vpop.permute.xlu0 %22
    %vm24 = vcmask 7168
    %s25 = scalar_lea.vmem %s1, 3
    %26 = vst.msk [vmem:[%s25] ss:$8 sm:$0xf] %vm24, %v23
    %v27 = vld [vmem:[#allocation0] sm:$0xf]
    %28 = vrot.lane.b32.xlu0 %v27, 124
    %v29 = vpop.permute.xlu0 %28
    %vm30 = vcmask 7168
    %s31 = scalar_lea.vmem %s1, 4
    %32 = vst.msk [vmem:[%s31] ss:$8 sm:$0xf] %vm30, %v29
    %v33 = vld [vmem:[#allocation0] sm:$0xf]
    %34 = vrot.lane.b32.xlu0 %v33, 123
    %v35 = vpop.permute.xlu0 %34
    %vm36 = vcmask 7168
    %s37 = scalar_lea.vmem %s1, 5
    %38 = vst.msk [vmem:[%s37] ss:$8 sm:$0xf] %vm36, %v35
    %v39 = vld [vmem:[#allocation0] sm:$0xf]
    %40 = vrot.lane.b32.xlu0 %v39, 122
    %v41 = vpop.permute.xlu0 %40
    %vm42 = vcmask 7168
    %s43 = scalar_lea.vmem %s1, 6
    %44 = vst.msk [vmem:[%s43] ss:$8 sm:$0xf] %vm42, %v41
    %v45 = vld [vmem:[#allocation0] sm:$0xf]
    %46 = vrot.lane.b32.xlu0 %v45, 121
    %v47 = vpop.permute.xlu0 %46
    %vm48 = vcmask 7168
    %s49 = scalar_lea.vmem %s1, 7
    %50 = vst.msk [vmem:[%s49] ss:$8 sm:$0xf] %vm48, %v47

// kernel: decoder_block_forward.1
$region0: #{decoder_block_forward.1}
  #allocation0 [shape = 'u32[]', space=smem, size = 0x4, offset = 0x4, fixed_abs, tag = 'smem constant byte address 0x4 - core index']
  #allocation1 [shape = 'u32[144,128]{1,0:T(1,128)}', space=vmem, size = 0x12000, scoped, tag = 'internal scratch']
  %s0 = inlined_call_operand.vmem [shape: bf16[2,16,24], index: 0, kind: input, shape index: {}]
  %s1 = inlined_call_operand.vmem [shape: bf16[16,16], index: 1, kind: input, shape index: {}]
  %s2 = inlined_call_operand.vmem [shape: f32[16,1], index: 2, kind: input, shape index: {}]
  %s3 = inlined_call_operand.vmem [shape: bf16[32,32], index: 3, kind: input, shape index: {}]
  %s4 = inlined_call_operand.vmem [shape: f32[32,1], index: 4, kind: input, shape index: {}]
  %s5 = inlined_call_operand.vmem [shape: f32[1,32,50], index: 5, kind: output, shape index: {}]
  %s6 = sld [smem:[#allocation0]]
  $region30: #{decoder_block_forward.1} parent=0
    _
  %s8 = ssub.s32 1, %s6
  %s9 = scalar_select 0, %s8, %s6
  // Predicated region
  $region2: #{decoder_block_forward.1} parent=0 // pred_check
    _
  $region3: #{decoder_block_forward.1} parent=0 // pred_check_branch
    %11 = sbr.rel (0) target = $region5
  $region4: #{decoder_block_forward.1} parent=0 // pred_region
    _
  $region5: #{decoder_block_forward.1} parent=0 // pred_fallthru
    _
  // Predicated region
  $region6: #{decoder_block_forward.1} parent=0 // pred_check
    _
  $region7: #{decoder_block_forward.1} parent=0 // pred_check_branch
    %13 = sbr.rel (0) target = $region9
  $region8: #{decoder_block_forward.1} parent=0 // pred_region
    _
  $region9: #{decoder_block_forward.1} parent=0 // pred_fallthru
    _
  // Predicated region
  $region10: #{decoder_block_forward.1} parent=0 // pred_check
    _
  $region11: #{decoder_block_forward.1} parent=0 // pred_check_branch
    %15 = sbr.rel (0) target = $region13
  $region12: #{decoder_block_forward.1} parent=0 // pred_region
    _
  $region13: #{decoder_block_forward.1} parent=0 // pred_fallthru
    _
  // Predicated region
  $region14: #{decoder_block_forward.1} parent=0 // pred_check
    _
  $region15: #{decoder_block_forward.1} parent=0 // pred_check_branch
    %17 = sbr.rel (0) target = $region17
  $region16: #{decoder_block_forward.1} parent=0 // pred_region
    _
  $region17: #{decoder_block_forward.1} parent=0 // pred_fallthru
    _
  // Predicated region
  $region18: #{decoder_block_forward.1} parent=0 // pred_check
    _
  $region19: #{decoder_block_forward.1} parent=0 // pred_check_branch
    %19 = sbr.rel (0) target = $region21
  $region20: #{decoder_block_forward.1} parent=0 // pred_region
    _
  $region21: #{decoder_block_forward.1} parent=0 // pred_fallthru
    _
  %v21 = vld [vmem:[%s0] sm:$0xf]
  %v22 = vld [vmem:[%s0 + $0x4] sm:$0xf]
  %s23 = scalar_lea.vmem %s0, 8
  %v24 = vld [vmem:[%s23] sm:$0xf]
  %v25 = vld [vmem:[%s23 + $0x4] sm:$0xf]
  %v28 = vunpack.c.l.b16 %v21
  %v29 = vunpack.c.l.b16 %v22
  %v30 = vpack.c.b16 %v29, %v28
  %v33 = vunpack.c.l.b16 %v24
  %v34 = vunpack.c.l.b16 %v25
  %v35 = vpack.c.b16 %v34, %v33
  %36 = vrot.lane.b32.xlu0 %v35, 24
  %v37 = vpop.permute.xlu0 %36
  %vm38 = vcmask 195584
  %v41 = vsel %vm38, %v30, %v37
  %v43 = vld [vmem:[%s1] sm:$0xf]
  %v44 = vld [vmem:[%s1 + $0x4] sm:$0xf]
  %v45 = vld [vmem:[%s2] sm:$0xff]
  %v46 = vld [vmem:[%s2 + $0x8] sm:$0xff]
  %48 = vset.pattern.permute.xlu0 0
  %49 = vperm.xlu0 %48, %v45
  %v50 = vpop.permute.xlu0 %49
  %53 = vset.pattern.permute.xlu0 0
  %54 = vperm.xlu0 %53, %v46
  %v55 = vpop.permute.xlu0 %54
  %v59 = vunpack.c.l.b16 %v43
  %v60 = vunpack.c.l.b16 %v44
  %v61 = vpack.c.b16 %v60, %v59
  %vm62 = vcmask 130048
  %v64 = vsel %vm62, %v61, 0
  %66 = vmatprep.subr.bf16.mxu0 0
  %67 = vmatpush1.bf16.msra.mxu0 %v41
  %68 = vmatprep.subr.bf16.mxu0 0
  %69 = vmatpush1.bf16.msra.mxu0 0
  %70 = vmatprep.subr.bf16.mxu0 0
  %71 = vmatpush1.bf16.msra.mxu0 0
  %72 = vmatprep.subr.bf16.mxu0 0
  %73 = vmatpush1.bf16.msra.mxu0 0
  %74 = vmatprep.subr.bf16.mxu0 0
  %75 = vmatpush1.bf16.msra.mxu0 0
  %76 = vmatprep.subr.bf16.mxu0 0
  %77 = vmatpush1.bf16.msra.mxu0 0
  %78 = vmatprep.subr.bf16.mxu0 0
  %79 = vmatpush1.bf16.msra.mxu0 0
  %80 = vmatprep.subr.bf16.mxu0 0
  %81 = vmatpush1.bf16.msra.mxu0 0
  %82 = vmatprep.subr.bf16.mxu0 0
  %83 = vmatpush1.bf16.msra.mxu0 0
  %84 = vmatprep.subr.bf16.mxu0 0
  %85 = vmatpush1.bf16.msra.mxu0 0
  %86 = vmatprep.subr.bf16.mxu0 0
  %87 = vmatpush1.bf16.msra.mxu0 0
  %88 = vmatprep.subr.bf16.mxu0 0
  %89 = vmatpush1.bf16.msra.mxu0 0
  %90 = vmatprep.subr.bf16.mxu0 0
  %91 = vmatpush1.bf16.msra.mxu0 0
  %92 = vmatprep.subr.bf16.mxu0 0
  %93 = vmatpush1.bf16.msra.mxu0 0
  %94 = vmatprep.subr.bf16.mxu0 0
  %95 = vmatpush1.bf16.msra.mxu0 0
  %96 = vmatprep.subr.bf16.mxu0 0
  %97 = vmatpush1.bf16.msra.mxu0 0
  %98 = vmatprep.mubr.bf16.mxu0 0
  %99 = vmatmul.mubr.bf16.gmra.mrb[0].mxu0 %v64
  %v100 = vpop.f32.mrb[0].mxu0
  %v101 = vadd.f32 %v50, %v100
  %v102 = vpop.f32.mrb[0].mxu0
  %v103 = vpop.f32.mrb[0].mxu0
  %v104 = vadd.f32 %v55, %v103
  %v105 = vpop.f32.mrb[0].mxu0
  %106 = vdwg.mxu0
  %v107 = vmax.f32 %v101, 0.0
  %v108 = vmax.f32 %v104, 0.0
  %v109 = vpack.c.bf16 %v108, %v107
  %111 = vrot.lane.b32.xlu0 %v109, 1
  %v112 = vpop.permute.xlu0 %111
  %vm113 = vcmask 7168
  %v116 = vsel %vm113, 0, %v112
  %vm117 = vcmask 203776
  %v118 = vsel %vm117, %v116, 0
  %120 = vrot.lane.b32.xlu0 %v118, 1
  %v121 = vpop.permute.xlu0 %120
  %122 = vrot.lane.b32.xlu0 %v109, 105
  %v123 = vpop.permute.xlu0 %122
  %v125 = vsel %vm113, 0, %v123
  %v126 = vsel %vm117, %v125, 0
  %128 = vrot.lane.b32.xlu0 %v126, 1
  %v129 = vpop.permute.xlu0 %128
  %130 = vrot.lane.b32.xlu0 %v118, 127
  %v131 = vpop.permute.xlu0 %130
  %132 = vrot.lane.b32.xlu0 %v121, 127
  %v133 = vpop.permute.xlu0 %132
  %134 = vrot.lane.b32.xlu0 %v126, 24
  %v135 = vpop.permute.xlu0 %134
  %136 = vrot.lane.b32.xlu0 %v129, 24
  %v137 = vpop.permute.xlu0 %136
  %v140 = vsel %vm117, %v131, %v135
  %v144 = vsel %vm117, %v133, %v137
  %v146 = vld [vmem:[%s3] sm:$0xf]
  %v147 = vld [vmem:[%s3 + $0x4] sm:$0xf]
  %v148 = vld [vmem:[%s3 + $0x8] sm:$0xf]
  %v149 = vld [vmem:[%s3 + $0xc] sm:$0xf]
  %v150 = vld [vmem:[%s4] sm:$0xff]
  %v151 = vld [vmem:[%s4 + $0x8] sm:$0xff]
  %v152 = vld [vmem:[%s4 + $0x10] sm:$0xff]
  %v153 = vld [vmem:[%s4 + $0x18] sm:$0xff]
  %155 = vset.pattern.permute.xlu0 0
  %156 = vperm.xlu0 %155, %v150
  %v157 = vpop.permute.xlu0 %156
  %160 = vset.pattern.permute.xlu0 0
  %161 = vperm.xlu0 %160, %v151
  %v162 = vpop.permute.xlu0 %161
  %165 = vset.pattern.permute.xlu0 0
  %166 = vperm.xlu0 %165, %v152
  %v167 = vpop.permute.xlu0 %166
  %170 = vset.pattern.permute.xlu0 0
  %171 = vperm.xlu0 %170, %v153
  %v172 = vpop.permute.xlu0 %171
  %v178 = vunpack.c.l.b16 %v146
  %v179 = vunpack.c.l.b16 %v147
  %v180 = vunpack.c.l.b16 %v148
  %v181 = vunpack.c.l.b16 %v149
  %v182 = vpack.c.b16 %v179, %v178
  %v183 = vpack.c.b16 %v181, %v180
  %vm184 = vcmask 261120
  %v186 = vsel %vm184, %v182, 0
  %v189 = vsel %vm184, %v183, 0
  %191 = vmatprep.subr.bf16.mxu0 0
  %192 = vmatpush1.bf16.msra.mxu0 %v140
  %193 = vmatprep.subr.bf16.mxu0 0
  %194 = vmatpush1.bf16.msra.mxu0 %v144
  %195 = vmatprep.subr.bf16.mxu0 0
  %196 = vmatpush1.bf16.msra.mxu0 0
  %197 = vmatprep.subr.bf16.mxu0 0
  %198 = vmatpush1.bf16.msra.mxu0 0
  %199 = vmatprep.subr.bf16.mxu0 0
  %200 = vmatpush1.bf16.msra.mxu0 0
  %201 = vmatprep.subr.bf16.mxu0 0
  %202 = vmatpush1.bf16.msra.mxu0 0
  %203 = vmatprep.subr.bf16.mxu0 0
  %204 = vmatpush1.bf16.msra.mxu0 0
  %205 = vmatprep.subr.bf16.mxu0 0
  %206 = vmatpush1.bf16.msra.mxu0 0
  %207 = vmatprep.subr.bf16.mxu0 0
  %208 = vmatpush1.bf16.msra.mxu0 0
  %209 = vmatprep.subr.bf16.mxu0 0
  %210 = vmatpush1.bf16.msra.mxu0 0
  %211 = vmatprep.subr.bf16.mxu0 0
  %212 = vmatpush1.bf16.msra.mxu0 0
  %213 = vmatprep.subr.bf16.mxu0 0
  %214 = vmatpush1.bf16.msra.mxu0 0
  %215 = vmatprep.subr.bf16.mxu0 0
  %216 = vmatpush1.bf16.msra.mxu0 0
  %217 = vmatprep.subr.bf16.mxu0 0
  %218 = vmatpush1.bf16.msra.mxu0 0
  %219 = vmatprep.subr.bf16.mxu0 0
  %220 = vmatpush1.bf16.msra.mxu0 0
  %221 = vmatprep.subr.bf16.mxu0 0
  %222 = vmatpush1.bf16.msra.mxu0 0
  %223 = vmatprep.mubr.bf16.mxu0 0
  %224 = vmatmul.mubr.bf16.gmra.mrb[0].mxu0 %v186
  %v225 = vpop.f32.mrb[0].mxu0
  %v226 = vadd.f32 %v157, %v225
  %v227 = vpop.f32.mrb[0].mxu0
  %v228 = vpop.f32.mrb[0].mxu0
  %v229 = vadd.f32 %v162, %v228
  %v230 = vpop.f32.mrb[0].mxu0
  %231 = vmatprep.mubr.bf16.mxu0 0
  %232 = vmatmul.mubr.bf16.gmra.mrb[0].mxu0 %v189
  %v233 = vpop.f32.mrb[0].mxu0
  %v234 = vadd.f32 %v167, %v233
  %v235 = vpop.f32.mrb[0].mxu0
  %v236 = vpop.f32.mrb[0].mxu0
  %v237 = vadd.f32 %v172, %v236
  %v238 = vpop.f32.mrb[0].mxu0
  %239 = vdwg.mxu0
  %v240 = vmax.f32 %v226, 0.0
  %v241 = vmax.f32 %v229, 0.0
  %v242 = vmax.f32 %v234, 0.0
  %v243 = vmax.f32 %v237, 0.0
  %vm244 = vcmask 408576
  %245 = vst.msk [vmem:[%s5] sm:$0xff] %vm244, %v240
  %246 = vst.msk [vmem:[%s5 + $0x8] sm:$0xff] %vm244, %v241
  %247 = vst.msk [vmem:[%s5 + $0x10] sm:$0xff] %vm244, %v242
  %248 = vst.msk [vmem:[%s5 + $0x18] sm:$0xff] %vm244, %v243
  // Predicated region
  $region22: #{decoder_block_forward.1} parent=0 // pred_check
    _
  $region23: #{decoder_block_forward.1} parent=0 // pred_check_branch
    %250 = sbr.rel (0) target = $region25
  $region24: #{decoder_block_forward.1} parent=0 // pred_region
    _
  $region25: #{decoder_block_forward.1} parent=0 // pred_fallthru
    _
  // Predicated region
  $region26: #{decoder_block_forward.1} parent=0 // pred_check
    _
  $region27: #{decoder_block_forward.1} parent=0 // pred_check_branch
    %252 = sbr.rel (0) target = $region29
  $region28: #{decoder_block_forward.1} parent=0 // pred_region
    _
  $region29: #{decoder_block_forward.1} parent=0 // pred_fallthru
    _

</llo_original>
